<compile_context>
chip_gen: v7x
topology: tpu7x:2x2x1
jax: 0.10.0
libtpu: 0.0.40
codegen_flags: <defaults>
</compile_context>

<pallas_src>
import jax
import jax.numpy as jnp
from jax.experimental import pallas as pl
from jax.experimental.pallas import tpu as pltpu


def _identity_kernel(x_ref, o_ref):
    # Straight VMEM tile copy (output aliases input in HBM).
    o_ref[...] = x_ref[...]


_TILE_BYTES = 4 * 1024 * 1024  # ~4 MiB per block


def _choose_lanes(n: int) -> int:
    """Largest lane-dense width (multiple of 128) dividing n exactly, else 0."""
    for lanes in (4096, 2048, 1024, 512, 256, 128):
        if n % lanes == 0:
            return lanes
    return 0


def _choose_tile_rows(rows: int, lanes: int, itemsize: int) -> int:
    """Tile height: multiple of 8 dividing rows (target ~4 MiB), else 0."""
    target = max(8, _TILE_BYTES // (lanes * itemsize))
    if rows <= target:
        return rows  # single full-extent block (always a legal block shape)
    t = (target // 8) * 8
    while t >= 8:
        if rows % t == 0:
            return t
        t -= 8
    return 0


def _identity_copy(x2: jax.Array, rows: int, lanes: int, tile_rows: int) -> jax.Array:
    return pl.pallas_call(
        _identity_kernel,
        out_shape=jax.ShapeDtypeStruct((rows, lanes), x2.dtype),
        grid=(rows // tile_rows,),
        in_specs=[pl.BlockSpec((tile_rows, lanes), lambda i: (i, 0))],
        out_specs=pl.BlockSpec((tile_rows, lanes), lambda i: (i, 0)),
        input_output_aliases={0: 0},  # output aliases input -> no extra HBM buffer
        compiler_params=pltpu.CompilerParams(
            dimension_semantics=("parallel",),  # v7x: shard the copy across both TCs
        ),
    )(x2)


@jax.jit
def _identity_impl(x: jax.Array) -> jax.Array:
    orig_shape = x.shape
    n = x.size
    if n == 0:
        return x  # nothing to copy

    itemsize = jnp.dtype(x.dtype).itemsize
    flat = x.reshape(-1)

    # ---- Fast path: exact (rows x lanes) factorization, no padding copy ----
    lanes = _choose_lanes(n)
    if lanes:
        rows = n // lanes
        tile_rows = _choose_tile_rows(rows, lanes, itemsize)
        if tile_rows:
            out2 = _identity_copy(flat.reshape(rows, lanes), rows, lanes, tile_rows)
            return out2.reshape(orig_shape)

    # ---- Fallback: tensor doesn't factor into full blocks -> pad once ----
    lanes = 1024 if n >= 1024 else 128
    tile_rows = max(8, _TILE_BYTES // (lanes * itemsize))
    rows = pl.cdiv(n, lanes)
    if rows > tile_rows:
        # Round rows up to a multiple of the tile height so every block is full.
        rows = pl.cdiv(rows, tile_rows) * tile_rows
    else:
        tile_rows = rows  # single full-extent block
    n_pad = rows * lanes
    flat_p = jnp.pad(flat, (0, n_pad - n)) if n_pad != n else flat

    out2 = _identity_copy(flat_p.reshape(rows, lanes), rows, lanes, tile_rows)
    out_flat = out2.reshape(-1)
    if n_pad != n:
        out_flat = out_flat[:n]
    return out_flat.reshape(orig_shape)


def identity(x: jax.Array) -> jax.Array:
    """Pallas implementation of Identity.forward: returns x unchanged."""
    return _identity_impl(x)


if __name__ == "__main__":
    key = jax.random.PRNGKey(0)

    # Small NCHW input consistent with a conv-style model: batch=2, ch=4, 16x16.
    x = jax.random.normal(key, (2, 4, 16, 16), dtype=jnp.float32)
    y = identity(x)
    jax.block_until_ready(y)
    assert y.shape == x.shape and y.dtype == x.dtype
    assert bool(jnp.all(y == x)), "Identity kernel did not return input exactly"

    # Ragged size (105 elements) exercises the padded fallback path.
    x2 = jax.random.normal(jax.random.PRNGKey(1), (3, 5, 7), dtype=jnp.float32)
    y2 = identity(x2)
    jax.block_until_ready(y2)
    assert y2.shape == x2.shape and bool(jnp.all(y2 == x2))

    # bf16 variant of the main shape (different itemsize / tiling).
    x3 = x.astype(jnp.bfloat16)
    y3 = identity(x3)
    jax.block_until_ready(y3)
    assert y3.dtype == jnp.bfloat16 and bool(jnp.all(y3 == x3))

    print("KERNEL_OK")
</pallas_src>

<mosaic_0001>
module attributes {stable_mosaic.version = 11 : i64} {
  func.func @_identity_kernel(%arg0: i32, %arg1: memref<1x2048xf32, #tpu.memory_space<vmem>>, %arg2: memref<1x2048xf32, #tpu.memory_space<vmem>>) attributes {dimension_semantics = [#tpu.dimension_semantics<parallel>], iteration_bounds = array<i64: 1>, scalar_prefetch = 0 : i64, scratch_operands = 0 : i64, tpu.core_type = #tpu.core_type<tc>, window_params = [{transform_indices = @transform_0, window_bounds = array<i64: 1, 2048>}, {transform_indices = @transform_1, window_bounds = array<i64: 1, 2048>}]} {
    %c0 = arith.constant 0 : index
    %c0_0 = arith.constant 0 : index
    %0 = vector.load %arg1[%c0, %c0_0] : memref<1x2048xf32, #tpu.memory_space<vmem>>, vector<1x2048xf32>
    %c0_1 = arith.constant 0 : index
    %c0_2 = arith.constant 0 : index
    %1 = vector.load %arg2[%c0_1, %c0_2] : memref<1x2048xf32, #tpu.memory_space<vmem>>, vector<1x2048xf32>
    tpu.vector_store %arg2[%c0_1, %c0_2], %0 {strides = array<i32>} : memref<1x2048xf32, #tpu.memory_space<vmem>>, vector<1x2048xf32>,
    return
  }
  func.func @transform_0(%arg0: i32) -> (i32, i32) {
    %c0_i32 = arith.constant 0 : i32
    %c0_i32_0 = arith.constant 0 : i32
    return %arg0, %c0_i32 : i32, i32
  }
  func.func @transform_1(%arg0: i32) -> (i32, i32) {
    %c0_i32 = arith.constant 0 : i32
    %c0_i32_0 = arith.constant 0 : i32
    return %arg0, %c0_i32 : i32, i32
  }
}

</mosaic_0001>

<llo_original>
// kernel: _identity_impl.1
$region0: #{_identity_impl.1}
  #allocation0 [shape = 'u32[]', space=smem, size = 0x4, offset = 0x4, fixed_abs, tag = 'smem constant byte address 0x4 - core index']
  #allocation1 [shape = 'u32[144,128]{1,0:T(1,128)}', space=vmem, size = 0x12000, scoped, tag = 'internal scratch']
  %s0 = inlined_call_operand.vmem [shape: f32[1,2048], index: 0, kind: input, shape index: {}, may-alias: {0,1}]
  %s1 = inlined_call_operand.vmem [shape: f32[1,2048], index: 1, kind: output, shape index: {}, may-alias: {0,1}]
  %s2 = sld [smem:[#allocation0]]
  $region14: #{_identity_impl.1} parent=0
    _
  %s4 = ssub.s32 1, %s2
  %s5 = scalar_select 0, %s4, %s2
  // Predicated region
  $region2: #{_identity_impl.1} parent=0 // pred_check
    _
  $region3: #{_identity_impl.1} parent=0 // pred_check_branch
    %7 = sbr.rel (0) target = $region5
  $region4: #{_identity_impl.1} parent=0 // pred_region
    _
  $region5: #{_identity_impl.1} parent=0 // pred_fallthru
    _
  %v8 = vld [vmem:[%s0] sm:$0xff]
  %v9 = vld [vmem:[%s0 + $0x8] sm:$0xff]
  %10 = vst [vmem:[%s1] sm:$0xff] %v8
  %11 = vst [vmem:[%s1 + $0x8] sm:$0xff] %v9
  // Predicated region
  $region6: #{_identity_impl.1} parent=0 // pred_check
    _
  $region7: #{_identity_impl.1} parent=0 // pred_check_branch
    %13 = sbr.rel (0) target = $region9
  $region8: #{_identity_impl.1} parent=0 // pred_region
    _
  $region9: #{_identity_impl.1} parent=0 // pred_fallthru
    _
  // Predicated region
  $region10: #{_identity_impl.1} parent=0 // pred_check
    _
  $region11: #{_identity_impl.1} parent=0 // pred_check_branch
    %15 = sbr.rel (0) target = $region13
  $region12: #{_identity_impl.1} parent=0 // pred_region
    _
  $region13: #{_identity_impl.1} parent=0 // pred_fallthru
    _

</llo_original>
